<compile_context>
chip_gen: v7x
topology: tpu7x:2x2x1
jax: 0.10.0
libtpu: 0.0.40
codegen_flags: <defaults>
</compile_context>

<pallas_src>
import jax
import jax.numpy as jnp
from jax.experimental import pallas as pl
from jax.experimental.pallas import tpu as pltpu


def time_embedding_kernel(x_ref, w1_ref, b1_ref, w2_ref, b2_ref, o_ref, h_ref):
    # Grid step 0: compute h = silu(x @ w1 + b1) once, keep it resident in VMEM.
    @pl.when(pl.program_id(0) == 0)
    def _():
        h = jnp.dot(x_ref[...].astype(jnp.bfloat16), w1_ref[...],
                    preferred_element_type=jnp.float32)
        h = h + b1_ref[...]
        h_ref[...] = h * jax.nn.sigmoid(h)

    # Every grid step: one column tile of linear_2.
    out = jnp.dot(h_ref[...].astype(jnp.bfloat16), w2_ref[...],
                  preferred_element_type=jnp.float32)
    out = out + b2_ref[...]
    o_ref[...] = out.astype(o_ref.dtype)


def time_embedding(x, w1, b1, w2, b2, *, tn=128):
    """x: (B, D) f32; w1: (D, H) bf16; b1: (1, H) f32; w2: (H, H) bf16; b2: (1, H) f32."""
    B, D = x.shape
    H = w1.shape[1]  # 4 * d_embed
    assert w2.shape == (H, H) and b1.shape == (1, H) and b2.shape == (1, H)
    tn = min(tn, H)
    assert H % tn == 0
    grid = (H // tn,)

    vmem = pltpu.MemorySpace.VMEM
    cost = pl.CostEstimate(
        flops=2 * B * (D * H + H * H),
        transcendentals=B * H,  # sigmoid
        bytes_accessed=(x.size * x.dtype.itemsize
                        + w1.size * w1.dtype.itemsize
                        + b1.size * b1.dtype.itemsize
                        + w2.size * w2.dtype.itemsize
                        + b2.size * b2.dtype.itemsize
                        + B * H * x.dtype.itemsize),
    )

    return pl.pallas_call(
        time_embedding_kernel,
        out_shape=jax.ShapeDtypeStruct((B, H), x.dtype),
        grid=grid,
        in_specs=[
            pl.BlockSpec((B, D), lambda j: (0, 0), memory_space=vmem),   # x
            pl.BlockSpec((D, H), lambda j: (0, 0), memory_space=vmem),   # w1
            pl.BlockSpec((1, H), lambda j: (0, 0), memory_space=vmem),   # b1
            pl.BlockSpec((H, tn), lambda j: (0, j), memory_space=vmem),  # w2 col tile
            pl.BlockSpec((1, tn), lambda j: (0, j), memory_space=vmem),  # b2 col tile
        ],
        out_specs=pl.BlockSpec((B, tn), lambda j: (0, j), memory_space=vmem),
        scratch_shapes=[pltpu.VMEM((B, H), jnp.float32)],  # resident h
        compiler_params=pltpu.CompilerParams(
            # Scratch h is written at step 0 and read at later steps -> sequential.
            dimension_semantics=("arbitrary",),
            vmem_limit_bytes=32 * 1024 * 1024,
        ),
        cost_estimate=cost,
    )(x, w1, b1, w2, b2)


def reference(x, w1_bf16, b1, w2_bf16, b2):
    # bf16-weight-faithful reference (same dtype strategy as the kernel).
    h = jnp.dot(x.astype(jnp.bfloat16), w1_bf16,
                preferred_element_type=jnp.float32) + b1
    h = h * jax.nn.sigmoid(h)
    return jnp.dot(h.astype(jnp.bfloat16), w2_bf16,
                   preferred_element_type=jnp.float32) + b2


if __name__ == "__main__":
    d_embed = 64            # small synthetic size (SD uses 320)
    hidden = 4 * d_embed    # 256
    batch = 8               # several timesteps / CFG branches batched together

    key = jax.random.PRNGKey(0)
    k_x, k_w1, k_b1, k_w2, k_b2 = jax.random.split(key, 5)

    x = jax.random.normal(k_x, (batch, d_embed), dtype=jnp.float32)

    # Deterministic parameter init mimicking PyTorch Linear default
    # (uniform(-1/sqrt(fan_in), 1/sqrt(fan_in))).  Weights stored (in, out).
    bound1 = 1.0 / jnp.sqrt(d_embed)
    w1 = jax.random.uniform(k_w1, (d_embed, hidden), jnp.float32, -bound1, bound1)
    b1 = jax.random.uniform(k_b1, (1, hidden), jnp.float32, -bound1, bound1)

    bound2 = 1.0 / jnp.sqrt(hidden)
    w2 = jax.random.uniform(k_w2, (hidden, hidden), jnp.float32, -bound2, bound2)
    b2 = jax.random.uniform(k_b2, (1, hidden), jnp.float32, -bound2, bound2)

    # Weights travel as bf16 (halved HBM traffic, native MXU dtype).
    w1_bf16 = w1.astype(jnp.bfloat16)
    w2_bf16 = w2.astype(jnp.bfloat16)

    out = time_embedding(x, w1_bf16, b1, w2_bf16, b2)
    jax.block_until_ready(out)

    ref = reference(x, w1_bf16, b1, w2_bf16, b2)
    assert out.shape == (batch, hidden)
    assert jnp.allclose(out, ref, atol=1e-2, rtol=1e-2), (
        float(jnp.max(jnp.abs(out - ref))))

    print("KERNEL_OK")
</pallas_src>

<mosaic_0001>
module attributes {stable_mosaic.version = 11 : i64} {
  func.func @time_embedding_kernel(%arg0: i32, %arg1: memref<8x64xf32, #tpu.memory_space<vmem>>, %arg2: memref<64x256xbf16, #tpu.memory_space<vmem>>, %arg3: memref<1x256xf32, #tpu.memory_space<vmem>>, %arg4: memref<256x128xbf16, #tpu.memory_space<vmem>>, %arg5: memref<1x128xf32, #tpu.memory_space<vmem>>, %arg6: memref<8x128xf32, #tpu.memory_space<vmem>>, %arg7: memref<8x256xf32, #tpu.memory_space<vmem>>) attributes {dimension_semantics = [#tpu.dimension_semantics<arbitrary>], iteration_bounds = array<i64: 2>, scalar_prefetch = 0 : i64, scratch_operands = 1 : i64, tpu.core_type = #tpu.core_type<tc>, window_params = [{pipeline_mode = #tpu.pipeline_mode<synchronous>, transform_indices = @transform_0, window_bounds = array<i64: 8, 64>}, {pipeline_mode = #tpu.pipeline_mode<synchronous>, transform_indices = @transform_1, window_bounds = array<i64: 64, 256>}, {pipeline_mode = #tpu.pipeline_mode<synchronous>, transform_indices = @transform_2, window_bounds = array<i64: 1, 256>}, {transform_indices = @transform_3, window_bounds = array<i64: 256, 128>}, {transform_indices = @transform_4, window_bounds = array<i64: 1, 128>}, {transform_indices = @transform_5, window_bounds = array<i64: 8, 128>}]} {
    %c0_i32 = arith.constant 0 : i32
    %0 = arith.cmpi eq, %arg0, %c0_i32 : i32
    %1 = arith.extui %0 : i1 to i32
    %c0_i32_0 = arith.constant 0 : i32
    %2 = arith.cmpi ne, %1, %c0_i32_0 : i32
    scf.if %2 {
      %c0_8 = arith.constant 0 : index
      %c0_9 = arith.constant 0 : index
      %11 = vector.load %arg1[%c0_8, %c0_9] : memref<8x64xf32, #tpu.memory_space<vmem>>, vector<8x64xf32>
      %12 = arith.truncf %11 : vector<8x64xf32> to vector<8x64xbf16>
      %c0_10 = arith.constant 0 : index
      %c0_11 = arith.constant 0 : index
      %13 = vector.load %arg2[%c0_10, %c0_11] : memref<64x256xbf16, #tpu.memory_space<vmem>>, vector<64x256xbf16>
      %cst_12 = arith.constant dense<0.000000e+00> : vector<8x256xf32>
      %14 = tpu.matmul %12, %13, %cst_12 {dimension_numbers = #tpu.dot_dimension_numbers<[1], [0], [0], [1], [0, 0, 1, 1], [], []>} : vector<8x64xbf16>, vector<64x256xbf16>, vector<8x256xf32> -> vector<8x256xf32>
      %c0_13 = arith.constant 0 : index
      %c0_14 = arith.constant 0 : index
      %15 = vector.load %arg3[%c0_13, %c0_14] : memref<1x256xf32, #tpu.memory_space<vmem>>, vector<1x256xf32>
      %16 = vector.broadcast %15 : vector<1x256xf32> to vector<8x256xf32>
      %17 = arith.addf %14, %16 : vector<8x256xf32>
      %18 = arith.negf %17 : vector<8x256xf32>
      %19 = math.exp %18 : vector<8x256xf32>
      %cst_15 = arith.constant 1.000000e+00 : f32
      %20 = vector.broadcast %cst_15 : f32 to vector<8x256xf32>
      %21 = arith.addf %20, %19 : vector<8x256xf32>
      %22 = arith.divf %20, %21 : vector<8x256xf32>
      %23 = arith.mulf %17, %22 : vector<8x256xf32>
      %c0_16 = arith.constant 0 : index
      %c0_17 = arith.constant 0 : index
      %24 = vector.load %arg7[%c0_16, %c0_17] : memref<8x256xf32, #tpu.memory_space<vmem>>, vector<8x256xf32>
      tpu.vector_store %arg7[%c0_16, %c0_17], %23 {strides = array<i32>} : memref<8x256xf32, #tpu.memory_space<vmem>>, vector<8x256xf32>,
    } else {
    }
    %c0 = arith.constant 0 : index
    %c0_1 = arith.constant 0 : index
    %3 = vector.load %arg7[%c0, %c0_1] : memref<8x256xf32, #tpu.memory_space<vmem>>, vector<8x256xf32>
    %4 = arith.truncf %3 : vector<8x256xf32> to vector<8x256xbf16>
    %c0_2 = arith.constant 0 : index
    %c0_3 = arith.constant 0 : index
    %5 = vector.load %arg4[%c0_2, %c0_3] : memref<256x128xbf16, #tpu.memory_space<vmem>>, vector<256x128xbf16>
    %cst = arith.constant dense<0.000000e+00> : vector<8x128xf32>
    %6 = tpu.matmul %4, %5, %cst {dimension_numbers = #tpu.dot_dimension_numbers<[1], [0], [0], [1], [0, 0, 1, 1], [], []>} : vector<8x256xbf16>, vector<256x128xbf16>, vector<8x128xf32> -> vector<8x128xf32>
    %c0_4 = arith.constant 0 : index
    %c0_5 = arith.constant 0 : index
    %7 = vector.load %arg5[%c0_4, %c0_5] : memref<1x128xf32, #tpu.memory_space<vmem>>, vector<1x128xf32>
    %8 = vector.broadcast %7 : vector<1x128xf32> to vector<8x128xf32>
    %9 = arith.addf %6, %8 : vector<8x128xf32>
    %c0_6 = arith.constant 0 : index
    %c0_7 = arith.constant 0 : index
    %10 = vector.load %arg6[%c0_6, %c0_7] : memref<8x128xf32, #tpu.memory_space<vmem>>, vector<8x128xf32>
    tpu.vector_store %arg6[%c0_6, %c0_7], %9 {strides = array<i32>} : memref<8x128xf32, #tpu.memory_space<vmem>>, vector<8x128xf32>,
    return
  }
  func.func @transform_0(%arg0: i32) -> (i32, i32) {
    %c0_i32 = arith.constant 0 : i32
    %c0_i32_0 = arith.constant 0 : i32
    %c0_i32_1 = arith.constant 0 : i32
    return %c0_i32, %c0_i32_0 : i32, i32
  }
  func.func @transform_1(%arg0: i32) -> (i32, i32) {
    %c0_i32 = arith.constant 0 : i32
    %c0_i32_0 = arith.constant 0 : i32
    %c0_i32_1 = arith.constant 0 : i32
    return %c0_i32, %c0_i32_0 : i32, i32
  }
  func.func @transform_2(%arg0: i32) -> (i32, i32) {
    %c0_i32 = arith.constant 0 : i32
    %c0_i32_0 = arith.constant 0 : i32
    %c0_i32_1 = arith.constant 0 : i32
    return %c0_i32, %c0_i32_0 : i32, i32
  }
  func.func @transform_3(%arg0: i32) -> (i32, i32) {
    %c0_i32 = arith.constant 0 : i32
    %c0_i32_0 = arith.constant 0 : i32
    return %c0_i32, %arg0 : i32, i32
  }
  func.func @transform_4(%arg0: i32) -> (i32, i32) {
    %c0_i32 = arith.constant 0 : i32
    %c0_i32_0 = arith.constant 0 : i32
    return %c0_i32, %arg0 : i32, i32
  }
  func.func @transform_5(%arg0: i32) -> (i32, i32) {
    %c0_i32 = arith.constant 0 : i32
    %c0_i32_0 = arith.constant 0 : i32
    return %c0_i32, %arg0 : i32, i32
  }
}

</mosaic_0001>

<llo_original>
// kernel: tpu_custom_call.1
$region0: #{tpu_custom_call.1}
  #allocation0 [shape = 'u32[]', space=smem, size = 0x4, offset = 0x4, fixed_abs, tag = 'smem constant byte address 0x4 - core index']
  #allocation1 [shape = 'u32[144,128]{1,0:T(1,128)}', space=vmem, size = 0x12000, scoped, tag = 'internal scratch']
  #allocation2 [shape = 'f32[8,256]{1,0:T(8,128)}', space=vmem, size = 0x2000, scoped, tag = 'scratch operand']
  %s0 = inlined_call_operand.hbm [shape: f32[8,64], index: 0, kind: input, shape index: {}]
  %s1 = inlined_call_operand.hbm [shape: bf16[64,256], index: 1, kind: input, shape index: {}]
  %s2 = inlined_call_operand.vmem [shape: f32[1,256], index: 2, kind: input, shape index: {}]
  %s3 = inlined_call_operand.hbm [shape: bf16[256,256], index: 3, kind: input, shape index: {}]
  %s4 = inlined_call_operand.vmem [shape: f32[1,256], index: 4, kind: input, shape index: {}]
  %s5 = inlined_call_operand.hbm [shape: f32[8,256], index: 5, kind: output, shape index: {}]
  %s6 = sld [smem:[#allocation0]]
  $region69: #{tpu_custom_call.1} parent=0
    _
  %s8 = ssub.s32 1, %s6
  %s9 = scalar_select 0, %s8, %s6
  $region1: #{tpu_custom_call.1} parent=0
    #allocation3 [shape = 'u8[4096]{0}', space=vmem, size = 0x1000, scoped, tag = 'input window, operand 0, single buffered']
    #allocation4 [shape = 's32[2]{0}', space=sflag, size = 0x8, scoped, tag = 'scoped memory for tpu_custom_call.1']
    #allocation5 [shape = 's32[2]{0}', space=sflag, size = 0x8, scoped, tag = 'scoped memory for tpu_custom_call.1']
    #allocation6 [shape = 'u8[32768]{0}', space=vmem, size = 0x8000, scoped, tag = 'input window, operand 1, single buffered']
    #allocation7 [shape = 's32[1]{0}', space=sflag, size = 0x4, scoped, tag = 'scoped memory for tpu_custom_call.1']
    #allocation8 [shape = 'u8[131072]{0}', space=vmem, size = 0x20000, scoped, tag = 'input window, operand 3']
    #allocation9 [shape = 'u8[8192]{0}', space=vmem, size = 0x2000, scoped, tag = 'output window, operand 0']
    %10 = vsyncpa [#allocation4], 0
    %11 = vsyncpa [#allocation7], 0
    %12 = vsyncpa [#allocation5], 0
    %s13 = scalar_lea.sflag [#allocation5], 1
    %14 = vsyncpa %s13, 0
    loop: start=0, step=1, limit=4
    $region2: #{tpu_custom_call.1} parent=1 // loop_pre_header
      _
    $region3: #{tpu_custom_call.1} parent=1 // loop_header
      %s16 = sphi 0, %s20
      %p17 = scmp.ge.s32.totalorder %s16, 4
      %s24 = sphi 0, %s24
      %s26 = sphi 0, %s24
      %s27 = sphi 0, %s26
      %s41 = sphi 0, %s27
      %s45 = sphi 0, %s45
      %s47 = sphi 0, %s45
      %s48 = sphi 0, %s47
      %s62 = sphi 0, %s48
      %s66 = sphi 0, %s66
      %s68 = sphi 0, %s66
      %s69 = sphi 0, %s68
      %s83 = sphi 0, %s69
      %s89 = sphi 0, %s91
      %s92 = sphi 0, %s89
      %s93 = sphi 0, %s92
      %s109 = sphi 0, %s93
      %s115 = sphi 0, %s117
      %s118 = sphi 0, %s115
      %s119 = sphi 0, %s118
      %s135 = sphi 0, %s119
      %s141 = sphi 0, %s143
      %s144 = sphi 0, %s141
      %s145 = sphi 0, %s144
      %s161 = sphi 0, %s145
    $region4: #{tpu_custom_call.1} parent=1 // loop_header_branch
      %19 = sbr.rel (%p17) target = $region8
    $region5: #{tpu_custom_call.1} parent=1 // loop_body
      %s21 = ssub.s32 %s16, 1
      %s22 = ssub.s32 %s16, 2
      %s23 = sadd.s32 %s16, 1
      %s25 = sadd.s32 %s24, 1
      %p28 = scmp.eq.s32.totalorder %s16, 1
      %p29 = scmp.ne.s32.totalorder %s24, %s26
      %p30 = scmp.eq.s32.totalorder %s16, 0
      %p31 = por %p29, %p30
      %p32 = scmp.ne.s32.totalorder %s24, %s26
      %p33 = scmp.eq.s32.totalorder %s21, 1
      %p34 = por %p32, %p33
      %p35 = scmp.ne.s32.totalorder %s26, %s27
      %p36 = scmp.eq.s32.totalorder %s21, 0
      %p37 = por %p35, %p36
      %p38 = scmp.ne.s32.totalorder %s26, %s27
      %p39 = scmp.eq.s32.totalorder %s22, 1
      %p40 = por %p38, %p39
      %p42 = scmp.ne.s32.totalorder %s27, %s41
      %p43 = scmp.eq.s32.totalorder %s22, 0
      %p44 = por %p42, %p43
      %s46 = sadd.s32 %s45, 1
      %p49 = scmp.eq.s32.totalorder %s16, 1
      %p50 = scmp.ne.s32.totalorder %s45, %s47
      %p51 = scmp.eq.s32.totalorder %s16, 0
      %p52 = por %p50, %p51
      %p53 = scmp.ne.s32.totalorder %s45, %s47
      %p54 = scmp.eq.s32.totalorder %s21, 1
      %p55 = por %p53, %p54
      %p56 = scmp.ne.s32.totalorder %s47, %s48
      %p57 = scmp.eq.s32.totalorder %s21, 0
      %p58 = por %p56, %p57
      %p59 = scmp.ne.s32.totalorder %s47, %s48
      %p60 = scmp.eq.s32.totalorder %s22, 1
      %p61 = por %p59, %p60
      %p63 = scmp.ne.s32.totalorder %s48, %s62
      %p64 = scmp.eq.s32.totalorder %s22, 0
      %p65 = por %p63, %p64
      %s67 = sadd.s32 %s66, 1
      %p70 = scmp.eq.s32.totalorder %s16, 1
      %p71 = scmp.ne.s32.totalorder %s66, %s68
      %p72 = scmp.eq.s32.totalorder %s16, 0
      %p73 = por %p71, %p72
      %p74 = scmp.ne.s32.totalorder %s66, %s68
      %p75 = scmp.eq.s32.totalorder %s21, 1
      %p76 = por %p74, %p75
      %p77 = scmp.ne.s32.totalorder %s68, %s69
      %p78 = scmp.eq.s32.totalorder %s21, 0
      %p79 = por %p77, %p78
      %p80 = scmp.ne.s32.totalorder %s68, %s69
      %p81 = scmp.eq.s32.totalorder %s22, 1
      %p82 = por %p80, %p81
      %p84 = scmp.ne.s32.totalorder %s69, %s83
      %p85 = scmp.eq.s32.totalorder %s22, 0
      %p86 = por %p84, %p85
      %s87 = ssub.s32 %s16, %s23
      %p88 = scmp.eq.s32.totalorder %s87, 0
      %s90 = sadd.s32 %s89, 1
      %s91 = scalar_select %p88, %s89, %s90
      %p94 = pneg %p88
      %p95 = scmp.eq.s32.totalorder %s16, 1
      %p96 = por %p94, %p95
      %p97 = scmp.ne.s32.totalorder %s89, %s92
      %p98 = scmp.eq.s32.totalorder %s16, 0
      %p99 = por %p97, %p98
      %p100 = scmp.ne.s32.totalorder %s89, %s92
      %p101 = scmp.eq.s32.totalorder %s21, 1
      %p102 = por %p100, %p101
      %p103 = scmp.ne.s32.totalorder %s92, %s93
      %p104 = scmp.eq.s32.totalorder %s21, 0
      %p105 = por %p103, %p104
      %p106 = scmp.ne.s32.totalorder %s92, %s93
      %p107 = scmp.eq.s32.totalorder %s22, 1
      %p108 = por %p106, %p107
      %p110 = scmp.ne.s32.totalorder %s93, %s109
      %p111 = scmp.eq.s32.totalorder %s22, 0
      %p112 = por %p110, %p111
      %s113 = ssub.s32 %s16, %s23
      %p114 = scmp.eq.s32.totalorder %s113, 0
      %s116 = sadd.s32 %s115, 1
      %s117 = scalar_select %p114, %s115, %s116
      %p120 = pneg %p114
      %p121 = scmp.eq.s32.totalorder %s16, 1
      %p122 = por %p120, %p121
      %p123 = scmp.ne.s32.totalorder %s115, %s118
      %p124 = scmp.eq.s32.totalorder %s16, 0
      %p125 = por %p123, %p124
      %p126 = scmp.ne.s32.totalorder %s115, %s118
      %p127 = scmp.eq.s32.totalorder %s21, 1
      %p128 = por %p126, %p127
      %p129 = scmp.ne.s32.totalorder %s118, %s119
      %p130 = scmp.eq.s32.totalorder %s21, 0
      %p131 = por %p129, %p130
      %p132 = scmp.ne.s32.totalorder %s118, %s119
      %p133 = scmp.eq.s32.totalorder %s22, 1
      %p134 = por %p132, %p133
      %p136 = scmp.ne.s32.totalorder %s119, %s135
      %p137 = scmp.eq.s32.totalorder %s22, 0
      %p138 = por %p136, %p137
      %s139 = ssub.s32 %s16, %s23
      %p140 = scmp.eq.s32.totalorder %s139, 0
      %s142 = sadd.s32 %s141, 1
      %s143 = scalar_select %p140, %s141, %s142
      %p146 = pneg %p140
      %p147 = scmp.eq.s32.totalorder %s16, 1
      %p148 = por %p146, %p147
      %p149 = scmp.ne.s32.totalorder %s141, %s144
      %p150 = scmp.eq.s32.totalorder %s16, 0
      %p151 = por %p149, %p150
      %p152 = scmp.ne.s32.totalorder %s141, %s144
      %p153 = scmp.eq.s32.totalorder %s21, 1
      %p154 = por %p152, %p153
      %p155 = scmp.ne.s32.totalorder %s144, %s145
      %p156 = scmp.eq.s32.totalorder %s21, 0
      %p157 = por %p155, %p156
      %p158 = scmp.ne.s32.totalorder %s144, %s145
      %p159 = scmp.eq.s32.totalorder %s22, 1
      %p160 = por %p158, %p159
      %p162 = scmp.ne.s32.totalorder %s145, %s161
      %p163 = scmp.eq.s32.totalorder %s22, 0
      %p164 = por %p162, %p163
      %p165 = scmp.le.s32.totalorder 1, %s16
      %p166 = scmp.lt.s32.totalorder %s16, 3
      %p167 = pnand %p165, %p166
      %p168 = pneg %p167
      // Predicated region
      $region9: #{tpu_custom_call.1} parent=5 // pred_check
        _
      $region10: #{tpu_custom_call.1} parent=5 // pred_check_branch
        %170 = sbr.rel (%p167) target = $region12
      $region11: #{tpu_custom_call.1} parent=5 // pred_region
        %s171 = ssub.s32 %s16, 1
        // Predicated region
        $region13: #{tpu_custom_call.1} parent=11 // pred_check
          %p172 = pneg %p37
        $region14: #{tpu_custom_call.1} parent=11 // pred_check_branch
          %174 = sbr.rel (%p172) target = $region16
        $region15: #{tpu_custom_call.1} parent=11 // pred_region
          %s176 = ssub.s32 128, 128
          %177 = vsyncadd [#allocation4], %s176
          %s179 = sshll.u32 [#allocation3], 4
          %s180 = int_to_ptr.vmem [resolvable:$true] %s179
          %182 = dma.hbm_to_vmem [thread:$0]  %s0, 128, %s180, [#allocation4]
        $region16: #{tpu_custom_call.1} parent=11 // pred_fallthru
          _
        // Predicated region
        $region17: #{tpu_custom_call.1} parent=11 // pred_check
          %p183 = pneg %p58
        $region18: #{tpu_custom_call.1} parent=11 // pred_check_branch
          %185 = sbr.rel (%p183) target = $region20
        $region19: #{tpu_custom_call.1} parent=11 // pred_region
          %s187 = ssub.s32 1024, 1024
          %188 = vsyncadd [#allocation7], %s187
          %s189 = sshll.u32 [#allocation6], 4
          %s190 = int_to_ptr.vmem [resolvable:$true] %s189
          %195 = dma.hbm_to_vmem [thread:$0]  %s1, 1024, %s190, [#allocation7], 128, 128, 8
        $region20: #{tpu_custom_call.1} parent=11 // pred_fallthru
          _
        // Predicated region
        $region21: #{tpu_custom_call.1} parent=11 // pred_check
          %p196 = pneg %p79
        $region22: #{tpu_custom_call.1} parent=11 // pred_check_branch
          %198 = sbr.rel (%p196) target = $region24
        $region23: #{tpu_custom_call.1} parent=11 // pred_region
          _
        $region24: #{tpu_custom_call.1} parent=11 // pred_fallthru
          _
      $region12: #{tpu_custom_call.1} parent=5 // pred_fallthru
        _
      %p199 = scmp.lt.s32.totalorder %s16, 2
      // Predicated region
      $region25: #{tpu_custom_call.1} parent=5 // pred_check
        %p200 = pneg %p199
      $region26: #{tpu_custom_call.1} parent=5 // pred_check_branch
        %202 = sbr.rel (%p200) target = $region28
      $region27: #{tpu_custom_call.1} parent=5 // pred_region
        // Predicated region
        $region29: #{tpu_custom_call.1} parent=27 // pred_check
          %p203 = pneg %p99
        $region30: #{tpu_custom_call.1} parent=27 // pred_check_branch
          %205 = sbr.rel (%p203) target = $region32
        $region31: #{tpu_custom_call.1} parent=27 // pred_region
          %s206 = sand.u32 %s16, 1
          %s207 = scalar_lea.sflag [#allocation4], %s206
          %s208 = sand.u32 %s89, 1
          %s209 = smul.addr %s208, 128
          %s210 = scalar_lea.vmem [#allocation8], %s209
          %s212 = ssub.s32 2048, 2048
          %213 = vsyncadd %s207, %s212
          %s214 = smul.addr %s16, 64
          %s215 = scalar_lea.hbm %s3, %s214
          %s216 = sshll.u32 %s210, 4
          %s217 = int_to_ptr.vmem [resolvable:$true] %s216
          %222 = dma.hbm_to_vmem [thread:$0]  %s215, 2048, %s217, %s207, 128, 64, 4
        $region32: #{tpu_custom_call.1} parent=27 // pred_fallthru
          _
        // Predicated region
        $region33: #{tpu_custom_call.1} parent=27 // pred_check
          %p223 = pneg %p125
        $region34: #{tpu_custom_call.1} parent=27 // pred_check_branch
          %225 = sbr.rel (%p223) target = $region36
        $region35: #{tpu_custom_call.1} parent=27 // pred_region
          %p226 = scmp.lt.s32.totalorder %s16, 1
          %s227 = scalar_select %p226, %s16, 1
          %s228 = scalar_lea.vmem %s4, %s227
        $region36: #{tpu_custom_call.1} parent=27 // pred_fallthru
          _
      $region28: #{tpu_custom_call.1} parent=5 // pred_fallthru
        _
      %p229 = scmp.le.s32.totalorder 1, %s16
      %p230 = scmp.lt.s32.totalorder %s16, 3
      %p231 = pnand %p229, %p230
      %p232 = pneg %p231
      // Predicated region
      $region37: #{tpu_custom_call.1} parent=5 // pred_check
        _
      $region38: #{tpu_custom_call.1} parent=5 // pred_check_branch
        %234 = sbr.rel (%p231) target = $region40
      $region39: #{tpu_custom_call.1} parent=5 // pred_region
        %s235 = ssub.s32 %s16, 1
        // Predicated region
        $region41: #{tpu_custom_call.1} parent=39 // pred_check
          %p236 = pneg %p37
        $region42: #{tpu_custom_call.1} parent=39 // pred_check_branch
          %238 = sbr.rel (%p236) target = $region44
        $region43: #{tpu_custom_call.1} parent=39 // pred_region
          %239 = dma.done [#allocation4], 128
        $region44: #{tpu_custom_call.1} parent=39 // pred_fallthru
          _
        // Predicated region
        $region45: #{tpu_custom_call.1} parent=39 // pred_check
          %p240 = pneg %p58
        $region46: #{tpu_custom_call.1} parent=39 // pred_check_branch
          %242 = sbr.rel (%p240) target = $region48
        $region47: #{tpu_custom_call.1} parent=39 // pred_region
          %243 = dma.done [#allocation7], 1024
        $region48: #{tpu_custom_call.1} parent=39 // pred_fallthru
          _
        %s244 = sand.u32 %s21, 1
        %s245 = scalar_lea.sflag [#allocation4], %s244
        %s246 = sand.u32 %s92, 1
        %s247 = smul.addr %s246, 128
        %s248 = scalar_lea.vmem [#allocation8], %s247
        // Predicated region
        $region49: #{tpu_custom_call.1} parent=39 // pred_check
          %p249 = pneg %p105
        $region50: #{tpu_custom_call.1} parent=39 // pred_check_branch
          %251 = sbr.rel (%p249) target = $region52
        $region51: #{tpu_custom_call.1} parent=39 // pred_region
          %252 = dma.done %s245, 2048
        $region52: #{tpu_custom_call.1} parent=39 // pred_fallthru
          _
        %p253 = pneg %p37
        %p254 = pneg %p34
        %p255 = pneg %p58
        %p256 = pneg %p55
        %p257 = pneg %p79
        %p258 = pneg %p76
        %s259 = sand.u32 %s21, 1
        %s260 = scalar_lea.sflag [#allocation4], %s259
        %s261 = sand.u32 %s92, 1
        %s262 = smul.addr %s261, 128
        %s263 = scalar_lea.vmem [#allocation8], %s262
        %p264 = pneg %p105
        %p265 = pneg %p102
        %p266 = scmp.lt.s32.totalorder %s21, 1
        %s267 = scalar_select %p266, %s21, 1
        %s268 = scalar_lea.vmem %s4, %s267
        %p269 = pneg %p131
        %p270 = pneg %p128
        %p271 = pneg %p157
        %p272 = pneg %p154
        %s273 = sand.u32 %s144, 1
        %s274 = scalar_lea.sflag [#allocation5], %s273
        %s275 = sand.u32 %s144, 1
        %s276 = smul.addr %s275, 8
        %s277 = scalar_lea.vmem [#allocation9], %s276
        %p278 = scmp.lt.s32.totalorder %s21, 1
        %s279 = scalar_select %p278, %s21, 1
        %s280 = scalar_lea.vmem %s4, %s279
        %p282 = scmp.eq.s32.totalorder %s21, 0
        // Predicated region
        $region53: #{tpu_custom_call.1} parent=39 // pred_check
          %p283 = pneg %p282
        $region54: #{tpu_custom_call.1} parent=39 // pred_check_branch
          %285 = sbr.rel (%p283) target = $region56
        $region55: #{tpu_custom_call.1} parent=39 // pred_region
          %v286 = vld [vmem:[#allocation3] sm:$0xff]
          %v287 = vpack.c.bf16 %v286, %v286
          %v288 = vld [vmem:[#allocation6] sm:$0xff]
          %v289 = vld [vmem:[#allocation6 + $0x8] sm:$0xff]
          %v290 = vld [vmem:[#allocation6 + $0x10] sm:$0xff]
          %v291 = vld [vmem:[#allocation6 + $0x18] sm:$0xff]
          %v292 = vld [vmem:[#allocation6 + $0x20] sm:$0xff]
          %v293 = vld [vmem:[#allocation6 + $0x28] sm:$0xff]
          %v294 = vld [vmem:[#allocation6 + $0x30] sm:$0xff]
          %v295 = vld [vmem:[#allocation6 + $0x38] sm:$0xff]
          %v296 = vld [vmem:[%s2] sm:$0x3]
          %v298 = vlaneseq
          %v299 = vshrl.u32 %v298, 7
          %v300 = vsub.s32 0, %v299
          %v301 = vrot.slane %v296, %v300
          %v302 = vlaneseq
          %v303 = vshrl.u32 %v302, 7
          %v304 = vsub.s32 1, %v303
          %v305 = vrot.slane %v296, %v304
          %v316 = vunpack.c.l.b16 %v288
          %v317 = vunpack.c.h.b16 %v288
          %v318 = vunpack.c.l.b16 %v289
          %v319 = vunpack.c.h.b16 %v289
          %v320 = vunpack.c.l.b16 %v290
          %v321 = vunpack.c.h.b16 %v290
          %v322 = vunpack.c.l.b16 %v291
          %v323 = vunpack.c.h.b16 %v291
          %v324 = vunpack.c.l.b16 %v292
          %v325 = vunpack.c.h.b16 %v292
          %v326 = vunpack.c.l.b16 %v293
          %v327 = vunpack.c.h.b16 %v293
          %v328 = vunpack.c.l.b16 %v294
          %v329 = vunpack.c.h.b16 %v294
          %v330 = vunpack.c.l.b16 %v295
          %v331 = vunpack.c.h.b16 %v295
          %v332 = vpack.c.b16 %v318, %v316
          %v333 = vpack.c.b16 %v319, %v317
          %v334 = vpack.c.b16 %v322, %v320
          %v335 = vpack.c.b16 %v323, %v321
          %v336 = vpack.c.b16 %v326, %v324
          %v337 = vpack.c.b16 %v327, %v325
          %v338 = vpack.c.b16 %v330, %v328
          %v339 = vpack.c.b16 %v331, %v329
          %vm348 = vcmask 523264
          %v350 = vsel %vm348, %v287, 0
          %352 = vmatprep.subr.bf16.mxu0 %v333
          %353 = vmatpush1.bf16.msra.mxu0 %v332
          %354 = vmatprep.subr.bf16.mxu0 %v335
          %355 = vmatpush1.bf16.msra.mxu0 %v334
          %356 = vmatprep.subr.bf16.mxu0 %v337
          %357 = vmatpush1.bf16.msra.mxu0 %v336
          %358 = vmatprep.subr.bf16.mxu0 %v339
          %359 = vmatpush1.bf16.msra.mxu0 %v338
          %360 = vmatprep.subr.bf16.mxu0 0
          %361 = vmatpush1.bf16.msra.mxu0 0
          %362 = vmatprep.subr.bf16.mxu0 0
          %363 = vmatpush1.bf16.msra.mxu0 0
          %364 = vmatprep.subr.bf16.mxu0 0
          %365 = vmatpush1.bf16.msra.mxu0 0
          %366 = vmatprep.subr.bf16.mxu0 0
          %367 = vmatpush1.bf16.msra.mxu0 0
          %368 = vmatprep.subr.bf16.mxu0 0
          %369 = vmatpush1.bf16.msra.mxu0 0
          %370 = vmatprep.subr.bf16.mxu0 0
          %371 = vmatpush1.bf16.msra.mxu0 0
          %372 = vmatprep.subr.bf16.mxu0 0
          %373 = vmatpush1.bf16.msra.mxu0 0
          %374 = vmatprep.subr.bf16.mxu0 0
          %375 = vmatpush1.bf16.msra.mxu0 0
          %376 = vmatprep.subr.bf16.mxu0 0
          %377 = vmatpush1.bf16.msra.mxu0 0
          %378 = vmatprep.subr.bf16.mxu0 0
          %379 = vmatpush1.bf16.msra.mxu0 0
          %380 = vmatprep.subr.bf16.mxu0 0
          %381 = vmatpush1.bf16.msra.mxu0 0
          %382 = vmatprep.subr.bf16.mxu0 0
          %383 = vmatpush1.bf16.msra.mxu0 0
          %384 = vmatprep.mubr.bf16.mxu0 0
          %385 = vmatmul.mubr.bf16.gmra.mrb[0].mxu0 %v350
          %v386 = vpop.f32.mrb[0].mxu0
          %v387 = vadd.f32 %v301, %v386
          %v388 = vpop.f32.mrb[0].mxu0
          %v389 = vadd.f32 %v305, %v388
          %v390 = vpop.f32.mrb[0].mxu0
          %v391 = vpop.f32.mrb[0].mxu0
          %392 = vdwg.mxu0
          %v393 = vxor.u32 %v387, 2147483648
          %v394 = vxor.u32 %v389, 2147483648
          %v395 = vmul.f32 %v393, 1.442695
          %v396 = vpow.pop %v395
          %v397 = vmul.f32 %v394, 1.442695
          %v398 = vpow.pop %v397
          %v399 = vadd.f32 %v396, 1.0
          %v400 = vadd.f32 %v398, 1.0
          %v401 = vrcp.pop %v399
          %v402 = vmul.f32 1.0, %v401
          %v403 = vrcp.pop %v400
          %v404 = vmul.f32 1.0, %v403
          %v405 = vmul.f32 %v387, %v402
          %v406 = vmul.f32 %v389, %v404
          %407 = vst [vmem:[#allocation2] sm:$0xff] %v405
          %408 = vst [vmem:[#allocation2 + $0x8] sm:$0xff] %v406
        $region56: #{tpu_custom_call.1} parent=39 // pred_fallthru
          _
        %v409 = vld [vmem:[#allocation2] sm:$0xff]
        %v410 = vld [vmem:[#allocation2 + $0x8] sm:$0xff]
        %v411 = vpack.c.bf16 %v409, %v409
        %v412 = vpack.c.bf16 %v410, %v410
        %v413 = vld [vmem:[%s248] sm:$0xf]
        %v414 = vld [vmem:[%s248 + $0x4] sm:$0xf]
        %v415 = vld [vmem:[%s248 + $0x8] sm:$0xf]
        %v416 = vld [vmem:[%s248 + $0xc] sm:$0xf]
        %v417 = vld [vmem:[%s248 + $0x10] sm:$0xf]
        %v418 = vld [vmem:[%s248 + $0x14] sm:$0xf]
        %v419 = vld [vmem:[%s248 + $0x18] sm:$0xf]
        %v420 = vld [vmem:[%s248 + $0x1c] sm:$0xf]
        %v421 = vld [vmem:[%s248 + $0x20] sm:$0xf]
        %v422 = vld [vmem:[%s248 + $0x24] sm:$0xf]
        %v423 = vld [vmem:[%s248 + $0x28] sm:$0xf]
        %v424 = vld [vmem:[%s248 + $0x2c] sm:$0xf]
        %v425 = vld [vmem:[%s248 + $0x30] sm:$0xf]
        %v426 = vld [vmem:[%s248 + $0x34] sm:$0xf]
        %v427 = vld [vmem:[%s248 + $0x38] sm:$0xf]
        %v428 = vld [vmem:[%s248 + $0x3c] sm:$0xf]
        %v429 = vld [vmem:[%s248 + $0x40] sm:$0xf]
        %v430 = vld [vmem:[%s248 + $0x44] sm:$0xf]
        %v431 = vld [vmem:[%s248 + $0x48] sm:$0xf]
        %v432 = vld [vmem:[%s248 + $0x4c] sm:$0xf]
        %v433 = vld [vmem:[%s248 + $0x50] sm:$0xf]
        %v434 = vld [vmem:[%s248 + $0x54] sm:$0xf]
        %v435 = vld [vmem:[%s248 + $0x58] sm:$0xf]
        %v436 = vld [vmem:[%s248 + $0x5c] sm:$0xf]
        %v437 = vld [vmem:[%s248 + $0x60] sm:$0xf]
        %v438 = vld [vmem:[%s248 + $0x64] sm:$0xf]
        %v439 = vld [vmem:[%s248 + $0x68] sm:$0xf]
        %v440 = vld [vmem:[%s248 + $0x6c] sm:$0xf]
        %v441 = vld [vmem:[%s248 + $0x70] sm:$0xf]
        %v442 = vld [vmem:[%s248 + $0x74] sm:$0xf]
        %v443 = vld [vmem:[%s248 + $0x78] sm:$0xf]
        %v444 = vld [vmem:[%s248 + $0x7c] sm:$0xf]
        %v445 = vld [vmem:[%s280] sm:$0x1]
        %v447 = vlaneseq
        %v448 = vshrl.u32 %v447, 7
        %v449 = vsub.s32 0, %v448
        %v450 = vrot.slane %v445, %v449
        %v484 = vunpack.c.l.b16 %v413
        %v485 = vunpack.c.l.b16 %v414
        %v486 = vunpack.c.l.b16 %v415
        %v487 = vunpack.c.l.b16 %v416
        %v488 = vunpack.c.l.b16 %v417
        %v489 = vunpack.c.l.b16 %v418
        %v490 = vunpack.c.l.b16 %v419
        %v491 = vunpack.c.l.b16 %v420
        %v492 = vunpack.c.l.b16 %v421
        %v493 = vunpack.c.l.b16 %v422
        %v494 = vunpack.c.l.b16 %v423
        %v495 = vunpack.c.l.b16 %v424
        %v496 = vunpack.c.l.b16 %v425
        %v497 = vunpack.c.l.b16 %v426
        %v498 = vunpack.c.l.b16 %v427
        %v499 = vunpack.c.l.b16 %v428
        %v500 = vunpack.c.l.b16 %v429
        %v501 = vunpack.c.l.b16 %v430
        %v502 = vunpack.c.l.b16 %v431
        %v503 = vunpack.c.l.b16 %v432
        %v504 = vunpack.c.l.b16 %v433
        %v505 = vunpack.c.l.b16 %v434
        %v506 = vunpack.c.l.b16 %v435
        %v507 = vunpack.c.l.b16 %v436
        %v508 = vunpack.c.l.b16 %v437
        %v509 = vunpack.c.l.b16 %v438
        %v510 = vunpack.c.l.b16 %v439
        %v511 = vunpack.c.l.b16 %v440
        %v512 = vunpack.c.l.b16 %v441
        %v513 = vunpack.c.l.b16 %v442
        %v514 = vunpack.c.l.b16 %v443
        %v515 = vunpack.c.l.b16 %v444
        %v516 = vpack.c.b16 %v485, %v484
        %v517 = vpack.c.b16 %v487, %v486
        %v518 = vpack.c.b16 %v489, %v488
        %v519 = vpack.c.b16 %v491, %v490
        %v520 = vpack.c.b16 %v493, %v492
        %v521 = vpack.c.b16 %v495, %v494
        %v522 = vpack.c.b16 %v497, %v496
        %v523 = vpack.c.b16 %v499, %v498
        %v524 = vpack.c.b16 %v501, %v500
        %v525 = vpack.c.b16 %v503, %v502
        %v526 = vpack.c.b16 %v505, %v504
        %v527 = vpack.c.b16 %v507, %v506
        %v528 = vpack.c.b16 %v509, %v508
        %v529 = vpack.c.b16 %v511, %v510
        %v530 = vpack.c.b16 %v513, %v512
        %v531 = vpack.c.b16 %v515, %v514
        %548 = vmatprep.subr.bf16.mxu0 0
        %549 = vmatpush1.bf16.msra.mxu0 %v516
        %550 = vmatprep.subr.bf16.mxu0 0
        %551 = vmatpush1.bf16.msra.mxu0 %v517
        %552 = vmatprep.subr.bf16.mxu0 0
        %553 = vmatpush1.bf16.msra.mxu0 %v518
        %554 = vmatprep.subr.bf16.mxu0 0
        %555 = vmatpush1.bf16.msra.mxu0 %v519
        %556 = vmatprep.subr.bf16.mxu0 0
        %557 = vmatpush1.bf16.msra.mxu0 %v520
        %558 = vmatprep.subr.bf16.mxu0 0
        %559 = vmatpush1.bf16.msra.mxu0 %v521
        %560 = vmatprep.subr.bf16.mxu0 0
        %561 = vmatpush1.bf16.msra.mxu0 %v522
        %562 = vmatprep.subr.bf16.mxu0 0
        %563 = vmatpush1.bf16.msra.mxu0 %v523
        %564 = vmatprep.subr.bf16.mxu0 0
        %565 = vmatpush1.bf16.msra.mxu0 %v524
        %566 = vmatprep.subr.bf16.mxu0 0
        %567 = vmatpush1.bf16.msra.mxu0 %v525
        %568 = vmatprep.subr.bf16.mxu0 0
        %569 = vmatpush1.bf16.msra.mxu0 %v526
        %570 = vmatprep.subr.bf16.mxu0 0
        %571 = vmatpush1.bf16.msra.mxu0 %v527
        %572 = vmatprep.subr.bf16.mxu0 0
        %573 = vmatpush1.bf16.msra.mxu0 %v528
        %574 = vmatprep.subr.bf16.mxu0 0
        %575 = vmatpush1.bf16.msra.mxu0 %v529
        %576 = vmatprep.subr.bf16.mxu0 0
        %577 = vmatpush1.bf16.msra.mxu0 %v530
        %578 = vmatprep.subr.bf16.mxu0 0
        %579 = vmatpush1.bf16.msra.mxu0 %v531
        %580 = vmatprep.mubr.bf16.mxu0 %v412
        %581 = vmatmul.mubr.bf16.gmra.mrb[0].mxu0 %v411
        %v582 = vpop.f32.mrb[0].mxu0
        %v583 = vadd.f32 %v450, %v582
        %v584 = vpop.f32.mrb[0].mxu0
        %v585 = vpop.f32.mrb[0].mxu0
        %v586 = vpop.f32.mrb[0].mxu0
        %587 = vdwg.mxu0
        %588 = vst [vmem:[%s277] sm:$0xff] %v583
        %s589 = sand.u32 %s144, 1
        %s590 = scalar_lea.sflag [#allocation5], %s589
        %s591 = sand.u32 %s144, 1
        %s592 = smul.addr %s591, 8
        %s593 = scalar_lea.vmem [#allocation9], %s592
        // Predicated region
        $region57: #{tpu_custom_call.1} parent=39 // pred_check
          %p594 = pneg %p154
        $region58: #{tpu_custom_call.1} parent=39 // pred_check_branch
          %596 = sbr.rel (%p594) target = $region60
        $region59: #{tpu_custom_call.1} parent=39 // pred_region
          %s598 = ssub.s32 128, 128
          %599 = vsyncadd %s590, %s598
          %s600 = smul.addr %s21, 128
          %s601 = scalar_lea.hbm %s5, %s600
          %s603 = sshll.u32 %s593, 4
          %s604 = int_to_ptr.vmem [resolvable:$true] %s603
          %606 = dma.vmem_to_hbm [thread:$0]  %s604, 128, %s601, %s590
        $region60: #{tpu_custom_call.1} parent=39 // pred_fallthru
          _
      $region40: #{tpu_custom_call.1} parent=5 // pred_fallthru
        _
      %p607 = scmp.le.s32.totalorder 2, %s16
      // Predicated region
      $region61: #{tpu_custom_call.1} parent=5 // pred_check
        %p608 = pneg %p607
      $region62: #{tpu_custom_call.1} parent=5 // pred_check_branch
        %610 = sbr.rel (%p608) target = $region64
      $region63: #{tpu_custom_call.1} parent=5 // pred_region
        %s611 = ssub.s32 %s16, 2
        // Predicated region
        $region65: #{tpu_custom_call.1} parent=63 // pred_check
          %p612 = pneg %p160
        $region66: #{tpu_custom_call.1} parent=63 // pred_check_branch
          %614 = sbr.rel (%p612) target = $region68
        $region67: #{tpu_custom_call.1} parent=63 // pred_region
          %s615 = sand.u32 %s145, 1
          %s616 = scalar_lea.sflag [#allocation5], %s615
          %s617 = sand.u32 %s145, 1
          %s618 = smul.addr %s617, 8
          %s619 = scalar_lea.vmem [#allocation9], %s618
          %620 = dma.done %s616, 128
        $region68: #{tpu_custom_call.1} parent=63 // pred_fallthru
          _
      $region64: #{tpu_custom_call.1} parent=5 // pred_fallthru
        _
    $region6: #{tpu_custom_call.1} parent=1 // loop_footer
      %s20 = sadd.s32 1, %s16
    $region7: #{tpu_custom_call.1} parent=1 // loop_footer_branch
      %15 = sbr.rel target = $region3
    $region8: #{tpu_custom_call.1} parent=1 // loop_exit
      _
    %621 = vsyncpa [#allocation4], 1
    %s622 = scalar_lea.sflag [#allocation4], 1
    %623 = vsyncpa %s622, 1
    %624 = vsyncpa [#allocation7], 1
    %625 = vsyncpa [#allocation5], 1
    %s626 = scalar_lea.sflag [#allocation5], 1
    %627 = vsyncpa %s626, 1

</llo_original>
